<compile_context>
chip_gen: v5e
topology: v5e:2x2
jax: 0.10.0
libtpu: 0.0.40
codegen_flags: <defaults>
</compile_context>

<pallas_src>
import jax
import jax.numpy as jnp
from jax.experimental import pallas as pl
from jax.experimental.pallas import tpu as pltpu


def channel_attention_kernel(x_ref, w1_ref, b1_ref, w2_ref, b2_ref, o_ref):
    # x_ref: (BN, C, HW) block in native dtype; HW is lane-dense.
    x = x_ref[...]
    bn, c, hw = x.shape

    # AdaptiveAvgPool2d(1): mean over the flattened spatial axis, accumulated
    # in f32 without materializing an f32 copy of the whole block.
    pooled = jnp.sum(x, axis=-1, dtype=jnp.float32) * (1.0 / hw)     # (BN, C)

    # Conv2d(C, Cr, 1) on a 1x1 map: broadcast-multiply + lane-reduce over C.
    # Uses the original (Cr, C) weight layout -> no transpose, no MXU pass.
    w1 = w1_ref[...].astype(jnp.float32)                             # (Cr, C)
    b1 = b1_ref[...].astype(jnp.float32)                             # (1, Cr)
    h = jnp.sum(pooled[:, None, :] * w1[None, :, :], axis=-1) + b1   # (BN, Cr)
    h = jnp.maximum(h, 0.0)                                          # ReLU

    # Conv2d(Cr, C, 1): same trick with the (C, Cr) weight layout.
    w2 = w2_ref[...].astype(jnp.float32)                             # (C, Cr)
    b2 = b2_ref[...].astype(jnp.float32)                             # (1, C)
    s = jnp.sum(h[:, None, :] * w2[None, :, :], axis=-1) + b2        # (BN, C)
    s = jax.nn.sigmoid(s)

    # Rescale in the input's native dtype (bf16 multiply on v6e/v7x, f32 here).
    o_ref[...] = x * s.astype(x.dtype)[:, :, None]


def _choose_bn(N, C, HW, itemsize, vmem_budget_bytes):
    """Pick a batch block size BN that divides N, fits ~4x double-buffered
    blocks in the VMEM budget, and keeps >= 2 grid steps when N allows
    (so both TensorCores get work on v7x)."""
    block_bytes = C * HW * itemsize
    max_bn = max(1, vmem_budget_bytes // (4 * block_bytes))
    bn = 1
    for d in range(1, N + 1):
        if N % d == 0 and d <= max_bn:
            bn = d
    if N // bn < 2 and N >= 2:
        for d in range(bn, 0, -1):
            if N % d == 0 and N // d >= 2:
                bn = d
                break
    return bn


def channel_attention(x, w1, b1, w2, b2, *, vmem_budget_bytes=8 * 1024 * 1024):
    """x: (N, C, H, W); w1: (Cr, C); b1: (Cr,); w2: (C, Cr); b2: (C,)."""
    N, C, H, W = x.shape
    HW = H * W
    Cr = w1.shape[0]

    # Flatten spatial so the last (lane) dimension is dense.
    x_flat = x.reshape(N, C, HW)
    b1_2d = b1.reshape(1, Cr)
    b2_2d = b2.reshape(1, C)

    bn = _choose_bn(N, C, HW, jnp.dtype(x.dtype).itemsize, vmem_budget_bytes)
    grid_n = N // bn

    out_flat = pl.pallas_call(
        channel_attention_kernel,
        out_shape=jax.ShapeDtypeStruct((N, C, HW), x.dtype),
        grid_spec=pltpu.PrefetchScalarGridSpec(
            num_scalar_prefetch=0,
            grid=(grid_n,),
            in_specs=[
                pl.BlockSpec((bn, C, HW), lambda n: (n, 0, 0)),   # x (flattened)
                pl.BlockSpec((Cr, C), lambda n: (0, 0)),          # W1 (resident)
                pl.BlockSpec((1, Cr), lambda n: (0, 0)),          # b1 (resident)
                pl.BlockSpec((C, Cr), lambda n: (0, 0)),          # W2 (resident)
                pl.BlockSpec((1, C), lambda n: (0, 0)),           # b2 (resident)
            ],
            out_specs=pl.BlockSpec((bn, C, HW), lambda n: (n, 0, 0)),
        ),
        compiler_params=pltpu.CompilerParams(
            dimension_semantics=("parallel",),
            vmem_limit_bytes=32 * 1024 * 1024,
        ),
    )(x_flat, w1, b1_2d, w2, b2_2d)

    return out_flat.reshape(N, C, H, W)


def reference_channel_attention(x, w1, b1, w2, b2):
    pooled = jnp.mean(x.astype(jnp.float32), axis=(2, 3))          # (N, C)
    h = jnp.maximum(pooled @ w1.T + b1, 0.0)                       # (N, Cr)
    s = jax.nn.sigmoid(h @ w2.T + b2)                              # (N, C)
    return (x.astype(jnp.float32) * s[:, :, None, None]).astype(x.dtype)


if __name__ == "__main__":
    # Module config: num_features=4, reduction=2 -> hidden channels = 2.
    N, C, H, W = 2, 4, 16, 16
    reduction = 2
    Cr = C // reduction

    key = jax.random.PRNGKey(0)
    kx, kw1, kb1, kw2, kb2 = jax.random.split(key, 5)

    x = jax.random.normal(kx, (N, C, H, W), dtype=jnp.float32)
    # 1x1 conv weights squeezed to 2D (out_channels, in_channels).
    w1 = jax.random.normal(kw1, (Cr, C), dtype=jnp.float32) * 0.5
    b1 = jax.random.normal(kb1, (Cr,), dtype=jnp.float32) * 0.1
    w2 = jax.random.normal(kw2, (C, Cr), dtype=jnp.float32) * 0.5
    b2 = jax.random.normal(kb2, (C,), dtype=jnp.float32) * 0.1

    out = channel_attention(x, w1, b1, w2, b2)
    out = jax.block_until_ready(out)

    ref = reference_channel_attention(x, w1, b1, w2, b2)
    assert out.shape == (N, C, H, W)
    assert jnp.allclose(out, ref, atol=1e-5, rtol=1e-5), (
        f"max abs err = {jnp.max(jnp.abs(out - ref))}")

    print("KERNEL_OK")
</pallas_src>

<mosaic_0001>
module attributes {stable_mosaic.version = 11 : i64} {
  func.func @channel_attention_kernel(%arg0: i32, %arg1: memref<1x4x256xf32, #tpu.memory_space<vmem>>, %arg2: memref<2x4xf32, #tpu.memory_space<vmem>>, %arg3: memref<1x2xf32, #tpu.memory_space<vmem>>, %arg4: memref<4x2xf32, #tpu.memory_space<vmem>>, %arg5: memref<1x4xf32, #tpu.memory_space<vmem>>, %arg6: memref<1x4x256xf32, #tpu.memory_space<vmem>>) attributes {dimension_semantics = [#tpu.dimension_semantics<parallel>], iteration_bounds = array<i64: 2>, scalar_prefetch = 0 : i64, scratch_operands = 0 : i64, tpu.core_type = #tpu.core_type<tc>, window_params = [{transform_indices = @transform_0, window_bounds = array<i64: 1, 4, 256>}, {pipeline_mode = #tpu.pipeline_mode<synchronous>, transform_indices = @transform_1, window_bounds = array<i64: 2, 4>}, {pipeline_mode = #tpu.pipeline_mode<synchronous>, transform_indices = @transform_2, window_bounds = array<i64: 1, 2>}, {pipeline_mode = #tpu.pipeline_mode<synchronous>, transform_indices = @transform_3, window_bounds = array<i64: 4, 2>}, {pipeline_mode = #tpu.pipeline_mode<synchronous>, transform_indices = @transform_4, window_bounds = array<i64: 1, 4>}, {transform_indices = @transform_5, window_bounds = array<i64: 1, 4, 256>}]} {
    %c0 = arith.constant 0 : index
    %c0_0 = arith.constant 0 : index
    %c0_1 = arith.constant 0 : index
    %0 = vector.load %arg1[%c0, %c0_0, %c0_1] : memref<1x4x256xf32, #tpu.memory_space<vmem>>, vector<1x4x256xf32>
    %cst = arith.constant dense<0.000000e+00> : vector<1x4xf32>
    %1 = vector.multi_reduction <add>, %0, %cst [2] : vector<1x4x256xf32> to vector<1x4xf32>
    %cst_2 = arith.constant 3.906250e-03 : f32
    %2 = vector.broadcast %cst_2 : f32 to vector<1x4xf32>
    %3 = arith.mulf %1, %2 : vector<1x4xf32>
    %c0_3 = arith.constant 0 : index
    %c0_4 = arith.constant 0 : index
    %4 = vector.load %arg2[%c0_3, %c0_4] : memref<2x4xf32, #tpu.memory_space<vmem>>, vector<2x4xf32>
    %c0_5 = arith.constant 0 : index
    %c0_6 = arith.constant 0 : index
    %5 = vector.load %arg3[%c0_5, %c0_6] : memref<1x2xf32, #tpu.memory_space<vmem>>, vector<1x2xf32>
    %6 = vector.shape_cast %3 : vector<1x4xf32> to vector<1x1x4xf32>
    %7 = vector.shape_cast %4 : vector<2x4xf32> to vector<1x2x4xf32>
    %8 = vector.broadcast %6 : vector<1x1x4xf32> to vector<1x2x4xf32>
    %9 = arith.mulf %8, %7 : vector<1x2x4xf32>
    %cst_7 = arith.constant dense<0.000000e+00> : vector<1x2xf32>
    %10 = vector.multi_reduction <add>, %9, %cst_7 [2] : vector<1x2x4xf32> to vector<1x2xf32>
    %11 = arith.addf %10, %5 : vector<1x2xf32>
    %cst_8 = arith.constant 0.000000e+00 : f32
    %12 = vector.broadcast %cst_8 : f32 to vector<1x2xf32>
    %13 = arith.maximumf %11, %12 : vector<1x2xf32>
    %c0_9 = arith.constant 0 : index
    %c0_10 = arith.constant 0 : index
    %14 = vector.load %arg4[%c0_9, %c0_10] : memref<4x2xf32, #tpu.memory_space<vmem>>, vector<4x2xf32>
    %c0_11 = arith.constant 0 : index
    %c0_12 = arith.constant 0 : index
    %15 = vector.load %arg5[%c0_11, %c0_12] : memref<1x4xf32, #tpu.memory_space<vmem>>, vector<1x4xf32>
    %16 = vector.shape_cast %13 : vector<1x2xf32> to vector<1x1x2xf32>
    %17 = vector.shape_cast %14 : vector<4x2xf32> to vector<1x4x2xf32>
    %18 = vector.broadcast %16 : vector<1x1x2xf32> to vector<1x4x2xf32>
    %19 = arith.mulf %18, %17 : vector<1x4x2xf32>
    %cst_13 = arith.constant dense<0.000000e+00> : vector<1x4xf32>
    %20 = vector.multi_reduction <add>, %19, %cst_13 [2] : vector<1x4x2xf32> to vector<1x4xf32>
    %21 = arith.addf %20, %15 : vector<1x4xf32>
    %22 = arith.negf %21 : vector<1x4xf32>
    %23 = math.exp %22 : vector<1x4xf32>
    %cst_14 = arith.constant 1.000000e+00 : f32
    %24 = vector.broadcast %cst_14 : f32 to vector<1x4xf32>
    %25 = arith.addf %24, %23 : vector<1x4xf32>
    %26 = arith.divf %24, %25 : vector<1x4xf32>
    %27 = vector.shape_cast %26 : vector<1x4xf32> to vector<1x4x1xf32>
    %28 = vector.broadcast %27 : vector<1x4x1xf32> to vector<1x4x256xf32>
    %29 = arith.mulf %0, %28 : vector<1x4x256xf32>
    %c0_15 = arith.constant 0 : index
    %c0_16 = arith.constant 0 : index
    %c0_17 = arith.constant 0 : index
    %30 = vector.load %arg6[%c0_15, %c0_16, %c0_17] : memref<1x4x256xf32, #tpu.memory_space<vmem>>, vector<1x4x256xf32>
    tpu.vector_store %arg6[%c0_15, %c0_16, %c0_17], %29 {strides = array<i32>} : memref<1x4x256xf32, #tpu.memory_space<vmem>>, vector<1x4x256xf32>,
    return
  }
  func.func @transform_0(%arg0: i32) -> (i32, i32, i32) {
    %c0_i32 = arith.constant 0 : i32
    %c0_i32_0 = arith.constant 0 : i32
    %c0_i32_1 = arith.constant 0 : i32
    return %arg0, %c0_i32, %c0_i32_0 : i32, i32, i32
  }
  func.func @transform_1(%arg0: i32) -> (i32, i32) {
    %c0_i32 = arith.constant 0 : i32
    %c0_i32_0 = arith.constant 0 : i32
    %c0_i32_1 = arith.constant 0 : i32
    return %c0_i32, %c0_i32_0 : i32, i32
  }
  func.func @transform_2(%arg0: i32) -> (i32, i32) {
    %c0_i32 = arith.constant 0 : i32
    %c0_i32_0 = arith.constant 0 : i32
    %c0_i32_1 = arith.constant 0 : i32
    return %c0_i32, %c0_i32_0 : i32, i32
  }
  func.func @transform_3(%arg0: i32) -> (i32, i32) {
    %c0_i32 = arith.constant 0 : i32
    %c0_i32_0 = arith.constant 0 : i32
    %c0_i32_1 = arith.constant 0 : i32
    return %c0_i32, %c0_i32_0 : i32, i32
  }
  func.func @transform_4(%arg0: i32) -> (i32, i32) {
    %c0_i32 = arith.constant 0 : i32
    %c0_i32_0 = arith.constant 0 : i32
    %c0_i32_1 = arith.constant 0 : i32
    return %c0_i32, %c0_i32_0 : i32, i32
  }
  func.func @transform_5(%arg0: i32) -> (i32, i32, i32) {
    %c0_i32 = arith.constant 0 : i32
    %c0_i32_0 = arith.constant 0 : i32
    %c0_i32_1 = arith.constant 0 : i32
    return %arg0, %c0_i32, %c0_i32_0 : i32, i32, i32
  }
}

</mosaic_0001>

<llo_original>
// kernel: tpu_custom_call.1
$region0: #{tpu_custom_call.1}
  #allocation0 [shape = 'u32[]', space=smem, size = 0x4, offset = 0x4, fixed_abs, tag = 'smem constant byte address 0x4 - core index']
  #allocation1 [shape = 'u32[72,128]{1,0:T(1,128)}', space=vmem, size = 0x9000, scoped, tag = 'internal scratch']
  %s0 = inlined_call_operand.hbm [shape: f32[2,4,256], index: 0, kind: input, shape index: {}]
  %s1 = inlined_call_operand.vmem [shape: f32[2,4], index: 1, kind: input, shape index: {}]
  %s2 = inlined_call_operand.vmem [shape: f32[1,2], index: 2, kind: input, shape index: {}]
  %s3 = inlined_call_operand.vmem [shape: f32[4,2], index: 3, kind: input, shape index: {}]
  %s4 = inlined_call_operand.vmem [shape: f32[1,4], index: 4, kind: input, shape index: {}]
  %s5 = inlined_call_operand.hbm [shape: f32[2,4,256], index: 5, kind: output, shape index: {}]
  %s6 = sld [smem:[#allocation0]]
  $region57: #{tpu_custom_call.1} parent=0
    _
  %s8 = ssub.s32 1, %s6
  %s9 = scalar_select 0, %s8, %s6
  $region1: #{tpu_custom_call.1} parent=0
    #allocation2 [shape = 'u8[8192]{0}', space=vmem, size = 0x2000, scoped, tag = 'input window, operand 0']
    #allocation3 [shape = 's32[2]{0}', space=sflag, size = 0x8, scoped, tag = 'scoped memory for tpu_custom_call.1']
    #allocation4 [shape = 's32[2]{0}', space=sflag, size = 0x8, scoped, tag = 'scoped memory for tpu_custom_call.1']
    #allocation5 [shape = 'u8[8192]{0}', space=vmem, size = 0x2000, scoped, tag = 'output window, operand 0']
    %10 = vsyncpa [#allocation3], 0
    %s11 = scalar_lea.sflag [#allocation3], 1
    %12 = vsyncpa %s11, 0
    %13 = vsyncpa [#allocation4], 0
    %s14 = scalar_lea.sflag [#allocation4], 1
    %15 = vsyncpa %s14, 0
    loop: start=0, step=1, limit=4
    $region2: #{tpu_custom_call.1} parent=1 // loop_pre_header
      _
    $region3: #{tpu_custom_call.1} parent=1 // loop_header
      %s17 = sphi 0, %s21
      %p18 = scmp.ge.s32.totalorder %s17, 4
      %s27 = sphi 0, %s29
      %s30 = sphi 0, %s27
      %s31 = sphi 0, %s30
      %s47 = sphi 0, %s31
      %s51 = sphi 0, %s51
      %s53 = sphi 0, %s51
      %s54 = sphi 0, %s53
      %s68 = sphi 0, %s54
      %s72 = sphi 0, %s72
      %s74 = sphi 0, %s72
      %s75 = sphi 0, %s74
      %s89 = sphi 0, %s75
      %s93 = sphi 0, %s93
      %s95 = sphi 0, %s93
      %s96 = sphi 0, %s95
      %s110 = sphi 0, %s96
      %s114 = sphi 0, %s114
      %s116 = sphi 0, %s114
      %s117 = sphi 0, %s116
      %s131 = sphi 0, %s117
      %s137 = sphi 0, %s139
      %s140 = sphi 0, %s137
      %s141 = sphi 0, %s140
      %s157 = sphi 0, %s141
    $region4: #{tpu_custom_call.1} parent=1 // loop_header_branch
      %20 = sbr.rel (%p18) target = $region8
    $region5: #{tpu_custom_call.1} parent=1 // loop_body
      %s22 = ssub.s32 %s17, 1
      %s23 = ssub.s32 %s17, 2
      %s24 = sadd.s32 %s17, 1
      %s25 = ssub.s32 %s17, %s24
      %p26 = scmp.eq.s32.totalorder %s25, 0
      %s28 = sadd.s32 %s27, 1
      %s29 = scalar_select %p26, %s27, %s28
      %p32 = pneg %p26
      %p33 = scmp.eq.s32.totalorder %s17, 1
      %p34 = por %p32, %p33
      %p35 = scmp.ne.s32.totalorder %s27, %s30
      %p36 = scmp.eq.s32.totalorder %s17, 0
      %p37 = por %p35, %p36
      %p38 = scmp.ne.s32.totalorder %s27, %s30
      %p39 = scmp.eq.s32.totalorder %s22, 1
      %p40 = por %p38, %p39
      %p41 = scmp.ne.s32.totalorder %s30, %s31
      %p42 = scmp.eq.s32.totalorder %s22, 0
      %p43 = por %p41, %p42
      %p44 = scmp.ne.s32.totalorder %s30, %s31
      %p45 = scmp.eq.s32.totalorder %s23, 1
      %p46 = por %p44, %p45
      %p48 = scmp.ne.s32.totalorder %s31, %s47
      %p49 = scmp.eq.s32.totalorder %s23, 0
      %p50 = por %p48, %p49
      %s52 = sadd.s32 %s51, 1
      %p55 = scmp.eq.s32.totalorder %s17, 1
      %p56 = scmp.ne.s32.totalorder %s51, %s53
      %p57 = scmp.eq.s32.totalorder %s17, 0
      %p58 = por %p56, %p57
      %p59 = scmp.ne.s32.totalorder %s51, %s53
      %p60 = scmp.eq.s32.totalorder %s22, 1
      %p61 = por %p59, %p60
      %p62 = scmp.ne.s32.totalorder %s53, %s54
      %p63 = scmp.eq.s32.totalorder %s22, 0
      %p64 = por %p62, %p63
      %p65 = scmp.ne.s32.totalorder %s53, %s54
      %p66 = scmp.eq.s32.totalorder %s23, 1
      %p67 = por %p65, %p66
      %p69 = scmp.ne.s32.totalorder %s54, %s68
      %p70 = scmp.eq.s32.totalorder %s23, 0
      %p71 = por %p69, %p70
      %s73 = sadd.s32 %s72, 1
      %p76 = scmp.eq.s32.totalorder %s17, 1
      %p77 = scmp.ne.s32.totalorder %s72, %s74
      %p78 = scmp.eq.s32.totalorder %s17, 0
      %p79 = por %p77, %p78
      %p80 = scmp.ne.s32.totalorder %s72, %s74
      %p81 = scmp.eq.s32.totalorder %s22, 1
      %p82 = por %p80, %p81
      %p83 = scmp.ne.s32.totalorder %s74, %s75
      %p84 = scmp.eq.s32.totalorder %s22, 0
      %p85 = por %p83, %p84
      %p86 = scmp.ne.s32.totalorder %s74, %s75
      %p87 = scmp.eq.s32.totalorder %s23, 1
      %p88 = por %p86, %p87
      %p90 = scmp.ne.s32.totalorder %s75, %s89
      %p91 = scmp.eq.s32.totalorder %s23, 0
      %p92 = por %p90, %p91
      %s94 = sadd.s32 %s93, 1
      %p97 = scmp.eq.s32.totalorder %s17, 1
      %p98 = scmp.ne.s32.totalorder %s93, %s95
      %p99 = scmp.eq.s32.totalorder %s17, 0
      %p100 = por %p98, %p99
      %p101 = scmp.ne.s32.totalorder %s93, %s95
      %p102 = scmp.eq.s32.totalorder %s22, 1
      %p103 = por %p101, %p102
      %p104 = scmp.ne.s32.totalorder %s95, %s96
      %p105 = scmp.eq.s32.totalorder %s22, 0
      %p106 = por %p104, %p105
      %p107 = scmp.ne.s32.totalorder %s95, %s96
      %p108 = scmp.eq.s32.totalorder %s23, 1
      %p109 = por %p107, %p108
      %p111 = scmp.ne.s32.totalorder %s96, %s110
      %p112 = scmp.eq.s32.totalorder %s23, 0
      %p113 = por %p111, %p112
      %s115 = sadd.s32 %s114, 1
      %p118 = scmp.eq.s32.totalorder %s17, 1
      %p119 = scmp.ne.s32.totalorder %s114, %s116
      %p120 = scmp.eq.s32.totalorder %s17, 0
      %p121 = por %p119, %p120
      %p122 = scmp.ne.s32.totalorder %s114, %s116
      %p123 = scmp.eq.s32.totalorder %s22, 1
      %p124 = por %p122, %p123
      %p125 = scmp.ne.s32.totalorder %s116, %s117
      %p126 = scmp.eq.s32.totalorder %s22, 0
      %p127 = por %p125, %p126
      %p128 = scmp.ne.s32.totalorder %s116, %s117
      %p129 = scmp.eq.s32.totalorder %s23, 1
      %p130 = por %p128, %p129
      %p132 = scmp.ne.s32.totalorder %s117, %s131
      %p133 = scmp.eq.s32.totalorder %s23, 0
      %p134 = por %p132, %p133
      %s135 = ssub.s32 %s17, %s24
      %p136 = scmp.eq.s32.totalorder %s135, 0
      %s138 = sadd.s32 %s137, 1
      %s139 = scalar_select %p136, %s137, %s138
      %p142 = pneg %p136
      %p143 = scmp.eq.s32.totalorder %s17, 1
      %p144 = por %p142, %p143
      %p145 = scmp.ne.s32.totalorder %s137, %s140
      %p146 = scmp.eq.s32.totalorder %s17, 0
      %p147 = por %p145, %p146
      %p148 = scmp.ne.s32.totalorder %s137, %s140
      %p149 = scmp.eq.s32.totalorder %s22, 1
      %p150 = por %p148, %p149
      %p151 = scmp.ne.s32.totalorder %s140, %s141
      %p152 = scmp.eq.s32.totalorder %s22, 0
      %p153 = por %p151, %p152
      %p154 = scmp.ne.s32.totalorder %s140, %s141
      %p155 = scmp.eq.s32.totalorder %s23, 1
      %p156 = por %p154, %p155
      %p158 = scmp.ne.s32.totalorder %s141, %s157
      %p159 = scmp.eq.s32.totalorder %s23, 0
      %p160 = por %p158, %p159
      %p161 = scmp.le.s32.totalorder 1, %s17
      %p162 = scmp.lt.s32.totalorder %s17, 3
      %p163 = pnand %p161, %p162
      %p164 = pneg %p163
      // Predicated region
      $region9: #{tpu_custom_call.1} parent=5 // pred_check
        _
      $region10: #{tpu_custom_call.1} parent=5 // pred_check_branch
        %166 = sbr.rel (%p163) target = $region12
      $region11: #{tpu_custom_call.1} parent=5 // pred_region
        %s167 = ssub.s32 %s17, 1
        // Predicated region
        $region13: #{tpu_custom_call.1} parent=11 // pred_check
          %p168 = pneg %p64
        $region14: #{tpu_custom_call.1} parent=11 // pred_check_branch
          %170 = sbr.rel (%p168) target = $region16
        $region15: #{tpu_custom_call.1} parent=11 // pred_region
          _
        $region16: #{tpu_custom_call.1} parent=11 // pred_fallthru
          _
        // Predicated region
        $region17: #{tpu_custom_call.1} parent=11 // pred_check
          %p171 = pneg %p85
        $region18: #{tpu_custom_call.1} parent=11 // pred_check_branch
          %173 = sbr.rel (%p171) target = $region20
        $region19: #{tpu_custom_call.1} parent=11 // pred_region
          _
        $region20: #{tpu_custom_call.1} parent=11 // pred_fallthru
          _
        // Predicated region
        $region21: #{tpu_custom_call.1} parent=11 // pred_check
          %p174 = pneg %p106
        $region22: #{tpu_custom_call.1} parent=11 // pred_check_branch
          %176 = sbr.rel (%p174) target = $region24
        $region23: #{tpu_custom_call.1} parent=11 // pred_region
          _
        $region24: #{tpu_custom_call.1} parent=11 // pred_fallthru
          _
        // Predicated region
        $region25: #{tpu_custom_call.1} parent=11 // pred_check
          %p177 = pneg %p127
        $region26: #{tpu_custom_call.1} parent=11 // pred_check_branch
          %179 = sbr.rel (%p177) target = $region28
        $region27: #{tpu_custom_call.1} parent=11 // pred_region
          _
        $region28: #{tpu_custom_call.1} parent=11 // pred_fallthru
          _
      $region12: #{tpu_custom_call.1} parent=5 // pred_fallthru
        _
      %p180 = scmp.lt.s32.totalorder %s17, 2
      // Predicated region
      $region29: #{tpu_custom_call.1} parent=5 // pred_check
        %p181 = pneg %p180
      $region30: #{tpu_custom_call.1} parent=5 // pred_check_branch
        %183 = sbr.rel (%p181) target = $region32
      $region31: #{tpu_custom_call.1} parent=5 // pred_region
        // Predicated region
        $region33: #{tpu_custom_call.1} parent=31 // pred_check
          %p184 = pneg %p37
        $region34: #{tpu_custom_call.1} parent=31 // pred_check_branch
          %186 = sbr.rel (%p184) target = $region36
        $region35: #{tpu_custom_call.1} parent=31 // pred_region
          %s187 = sand.u32 %s27, 1
          %s188 = scalar_lea.sflag [#allocation3], %s187
          %s189 = sand.u32 %s27, 1
          %s190 = smul.addr %s189, 8
          %s191 = scalar_lea.vmem [#allocation2], %s190
          %193 = vsyncadd %s188, 0
          %s194 = smul.addr %s17, 2
          %s195 = smul.addr %s194, 4
          %s196 = scalar_lea.hbm %s0, %s195
          %s198 = sshll.u32 %s196, 4
          %s199 = int_to_ptr.hbm [resolvable:$true] %s198
          %s200 = sshll.u32 %s191, 4
          %s201 = int_to_ptr.vmem [resolvable:$true] %s200
          %203 = dma.hbm_to_vmem [thread:$0]  %s199, 128, %s201, %s188
        $region36: #{tpu_custom_call.1} parent=31 // pred_fallthru
          _
      $region32: #{tpu_custom_call.1} parent=5 // pred_fallthru
        _
      %p204 = scmp.le.s32.totalorder 1, %s17
      %p205 = scmp.lt.s32.totalorder %s17, 3
      %p206 = pnand %p204, %p205
      %p207 = pneg %p206
      // Predicated region
      $region37: #{tpu_custom_call.1} parent=5 // pred_check
        _
      $region38: #{tpu_custom_call.1} parent=5 // pred_check_branch
        %209 = sbr.rel (%p206) target = $region40
      $region39: #{tpu_custom_call.1} parent=5 // pred_region
        %s210 = ssub.s32 %s17, 1
        %s211 = sand.u32 %s30, 1
        %s212 = scalar_lea.sflag [#allocation3], %s211
        %s213 = sand.u32 %s30, 1
        %s214 = smul.addr %s213, 8
        %s215 = scalar_lea.vmem [#allocation2], %s214
        // Predicated region
        $region41: #{tpu_custom_call.1} parent=39 // pred_check
          %p216 = pneg %p43
        $region42: #{tpu_custom_call.1} parent=39 // pred_check_branch
          %218 = sbr.rel (%p216) target = $region44
        $region43: #{tpu_custom_call.1} parent=39 // pred_region
          %220 = dma.done %s212, 128
        $region44: #{tpu_custom_call.1} parent=39 // pred_fallthru
          _
        %s221 = sand.u32 %s30, 1
        %s222 = scalar_lea.sflag [#allocation3], %s221
        %s223 = sand.u32 %s30, 1
        %s224 = smul.addr %s223, 8
        %s225 = scalar_lea.vmem [#allocation2], %s224
        %p226 = pneg %p43
        %p227 = pneg %p40
        %p228 = pneg %p64
        %p229 = pneg %p61
        %p230 = pneg %p85
        %p231 = pneg %p82
        %p232 = pneg %p106
        %p233 = pneg %p103
        %p234 = pneg %p127
        %p235 = pneg %p124
        %p236 = pneg %p153
        %p237 = pneg %p150
        %s238 = sand.u32 %s140, 1
        %s239 = scalar_lea.sflag [#allocation4], %s238
        %s240 = sand.u32 %s140, 1
        %s241 = smul.addr %s240, 8
        %s242 = scalar_lea.vmem [#allocation5], %s241
        %v243 = vld [vmem:[%s215] sm:$0xff]
        %245 = vst [vmem:[#allocation1] ss:$2 sm:$0xff] %v243
        %v246 = vld.sshfl [vmem:[#allocation1] sm:$0xff pattern:$0x75316420]
        %v247 = vld.sshfl [vmem:[#allocation1 + $0x8] sm:$0xff pattern:$0x75316420]
        %vm250 = vcmask 1043456
        %v251 = vsel %vm250, %v246, 0.0
        %v252 = vsel %vm250, %v247, 0.0
        %v253 = vadd.f32 %v251, %v252
        %254 = vadd.xlane.f32.xlu0 %v253
        %v255 = vpop.xlane.xlu0 %254
        %v256 = vmul.f32 %v255, 0.00390625
        %v257 = vld [vmem:[%s1] sm:$0x3]
        %v258 = vld [vmem:[%s2] sm:$0x1]
        %v260 = vperm.slane %v257, 0
        %v261 = vlaneseq
        %v262 = vshrl.u32 %v261, 7
        %264 = vset.pattern.permute.xlu0 %v262
        %265 = vperm.xlu0 %264, %v260
        %v266 = vpop.permute.xlu0 %265
        %v267 = vperm.slane %v257, 1
        %v268 = vlaneseq
        %v269 = vshrl.u32 %v268, 7
        %271 = vset.pattern.permute.xlu0 %v269
        %272 = vperm.xlu0 %271, %v267
        %v273 = vpop.permute.xlu0 %272
        %v276 = vmul.f32 %v256, %v266
        %v277 = vmul.f32 %v256, %v273
        %280 = vset.pattern.permute.xlu0 0
        %281 = vperm.xlu0 %280, %v276
        %v282 = vpop.permute.xlu0 %281
        %283 = vset.pattern.permute.xlu0 0
        %284 = vperm.xlu0 %283, %v277
        %v285 = vpop.permute.xlu0 %284
        %v286 = vlaneseq
        %v287 = vand.u32 %v286, 127
        %v288 = vperm.slane %v282, %v287
        %v289 = vperm.slane %v285, %v287
        %vm290 = vcmask 1041409
        %v291 = vsel %vm290, %v289, %v288
        %vm293 = vcmask 25600
        %v294 = vsel %vm293, %v291, 0.0
        %295 = vadd.xlane.f32.xlu0 %v294
        %v296 = vpop.xlane.xlu0 %295
        %v298 = vperm.slane %v258, 0
        %v299 = vlaneseq
        %v300 = vshrl.u32 %v299, 7
        %302 = vset.pattern.permute.xlu0 %v300
        %303 = vperm.xlu0 %302, %v298
        %v304 = vpop.permute.xlu0 %303
        %v306 = vadd.f32 %v296, %v304
        %v307 = vmax.f32 %v306, 0.0
        %v308 = vld [vmem:[%s3] sm:$0xf]
        %v309 = vld [vmem:[%s4] sm:$0x1]
        %v311 = vperm.slane %v308, 0
        %v312 = vlaneseq
        %v313 = vshrl.u32 %v312, 7
        %315 = vset.pattern.permute.xlu0 %v313
        %316 = vperm.xlu0 %315, %v311
        %v317 = vpop.permute.xlu0 %316
        %v318 = vperm.slane %v308, 1
        %v319 = vlaneseq
        %v320 = vshrl.u32 %v319, 7
        %322 = vset.pattern.permute.xlu0 %v320
        %323 = vperm.xlu0 %322, %v318
        %v324 = vpop.permute.xlu0 %323
        %v325 = vperm.slane %v308, 2
        %v326 = vlaneseq
        %v327 = vshrl.u32 %v326, 7
        %329 = vset.pattern.permute.xlu0 %v327
        %330 = vperm.xlu0 %329, %v325
        %v331 = vpop.permute.xlu0 %330
        %v332 = vperm.slane %v308, 3
        %v333 = vlaneseq
        %v334 = vshrl.u32 %v333, 7
        %336 = vset.pattern.permute.xlu0 %v334
        %337 = vperm.xlu0 %336, %v332
        %v338 = vpop.permute.xlu0 %337
        %v343 = vmul.f32 %v307, %v317
        %v344 = vmul.f32 %v307, %v324
        %v345 = vmul.f32 %v307, %v331
        %v346 = vmul.f32 %v307, %v338
        %351 = vset.pattern.permute.xlu0 0
        %352 = vperm.xlu0 %351, %v343
        %v353 = vpop.permute.xlu0 %352
        %354 = vset.pattern.permute.xlu0 0
        %355 = vperm.xlu0 %354, %v344
        %v356 = vpop.permute.xlu0 %355
        %357 = vset.pattern.permute.xlu0 0
        %358 = vperm.xlu0 %357, %v345
        %v359 = vpop.permute.xlu0 %358
        %360 = vset.pattern.permute.xlu0 0
        %361 = vperm.xlu0 %360, %v346
        %v362 = vpop.permute.xlu0 %361
        %v363 = vperm.slane %v353, %v287
        %v364 = vperm.slane %v356, %v287
        %v365 = vperm.slane %v359, %v287
        %v366 = vperm.slane %v362, %v287
        %v367 = vsel %vm290, %v364, %v363
        %vm368 = vcmask 1042434
        %v369 = vsel %vm368, %v365, %v367
        %vm370 = vcmask 1043459
        %v371 = vsel %vm370, %v366, %v369
        %vm373 = vcmask 11264
        %v374 = vsel %vm373, %v371, 0.0
        %375 = vadd.xlane.f32.xlu0 %v374
        %v376 = vpop.xlane.xlu0 %375
        %v378 = vperm.slane %v309, 0
        %v379 = vlaneseq
        %v380 = vshrl.u32 %v379, 7
        %382 = vset.pattern.permute.xlu0 %v380
        %383 = vperm.xlu0 %382, %v378
        %v384 = vpop.permute.xlu0 %383
        %v386 = vadd.f32 %v376, %v384
        %v387 = vxor.u32 %v386, 2147483648
        %v388 = vmul.f32 %v387, 1.442695
        %v389 = vpow.pop %v388
        %v390 = vadd.f32 %v389, 1.0
        %v391 = vrcp.pop %v390
        %v392 = vmul.f32 %v390, %v391
        %v393 = vsub.f32 1.0, %v392
        %v394 = vmul.f32 %v391, %v393
        %v395 = vadd.f32 %v391, %v394
        %vm396 = vweird.f32 %v390
        %vm397 = vweird.f32 %v391
        %vm398 = vmor %vm396, %vm397
        %v399 = vsel %vm398, %v391, %v395
        %v400 = vand.u32 2147483647, %v390
        %vm401 = vcmp.eq.f32.partialorder %v400, 8.507059e+37
        %v402 = vand.u32 %v390, 2147483648
        %v403 = vor.u32 1.1754944e-38, %v402
        %v404 = vsel %vm401, %v403, %v399
        %v405 = vmul.f32 1.0, %v404
        %407 = vset.pattern.permute.xlu0 0
        %408 = vperm.xlu0 %407, %v405
        %v409 = vpop.permute.xlu0 %408
        %v411 = vunpack.c.l.s4 839922192
        %v412 = vunpack.c.0.s8 %v411
        %v413 = vperm.slane %v409, %v412
        %v415 = vmul.f32 %v243, %v413
        %416 = vst [vmem:[%s242] sm:$0xff] %v415
        %s417 = sand.u32 %s140, 1
        %s418 = scalar_lea.sflag [#allocation4], %s417
        %s419 = sand.u32 %s140, 1
        %s420 = smul.addr %s419, 8
        %s421 = scalar_lea.vmem [#allocation5], %s420
        // Predicated region
        $region45: #{tpu_custom_call.1} parent=39 // pred_check
          %p422 = pneg %p150
        $region46: #{tpu_custom_call.1} parent=39 // pred_check_branch
          %424 = sbr.rel (%p422) target = $region48
        $region47: #{tpu_custom_call.1} parent=39 // pred_region
          %426 = vsyncadd %s418, 0
          %s427 = smul.addr %s22, 2
          %s428 = smul.addr %s427, 4
          %s429 = scalar_lea.hbm %s5, %s428
          %s431 = sshll.u32 %s421, 4
          %s432 = int_to_ptr.vmem [resolvable:$true] %s431
          %s433 = sshll.u32 %s429, 4
          %s434 = int_to_ptr.hbm [resolvable:$true] %s433
          %436 = dma.vmem_to_hbm [thread:$0]  %s432, 128, %s434, %s418
        $region48: #{tpu_custom_call.1} parent=39 // pred_fallthru
          _
      $region40: #{tpu_custom_call.1} parent=5 // pred_fallthru
        _
      %p437 = scmp.le.s32.totalorder 2, %s17
      // Predicated region
      $region49: #{tpu_custom_call.1} parent=5 // pred_check
        %p438 = pneg %p437
      $region50: #{tpu_custom_call.1} parent=5 // pred_check_branch
        %440 = sbr.rel (%p438) target = $region52
      $region51: #{tpu_custom_call.1} parent=5 // pred_region
        %s441 = ssub.s32 %s17, 2
        // Predicated region
        $region53: #{tpu_custom_call.1} parent=51 // pred_check
          %p442 = pneg %p156
        $region54: #{tpu_custom_call.1} parent=51 // pred_check_branch
          %444 = sbr.rel (%p442) target = $region56
        $region55: #{tpu_custom_call.1} parent=51 // pred_region
          %s445 = sand.u32 %s141, 1
          %s446 = scalar_lea.sflag [#allocation4], %s445
          %s447 = sand.u32 %s141, 1
          %s448 = smul.addr %s447, 8
          %s449 = scalar_lea.vmem [#allocation5], %s448
          %451 = dma.done %s446, 128
        $region56: #{tpu_custom_call.1} parent=51 // pred_fallthru
          _
      $region52: #{tpu_custom_call.1} parent=5 // pred_fallthru
        _
    $region6: #{tpu_custom_call.1} parent=1 // loop_footer
      %s21 = sadd.s32 1, %s17
    $region7: #{tpu_custom_call.1} parent=1 // loop_footer_branch
      %16 = sbr.rel target = $region3
    $region8: #{tpu_custom_call.1} parent=1 // loop_exit
      _
    %452 = vsyncpa [#allocation3], 1
    %s453 = scalar_lea.sflag [#allocation3], 1
    %454 = vsyncpa %s453, 1
    %455 = vsyncpa [#allocation4], 1
    %s456 = scalar_lea.sflag [#allocation4], 1
    %457 = vsyncpa %s456, 1

</llo_original>
